<compile_context>
chip_gen: v5e
topology: v5e:2x2
jax: 0.10.0
libtpu: 0.0.40
codegen_flags: <defaults>
</compile_context>

<pallas_src>
import functools

import jax
import jax.numpy as jnp
import numpy as np
from jax.experimental import pallas as pl
from jax.experimental.pallas import tpu as pltpu

_LANE_CHOICES = (1024, 512, 256, 128)
_MIN_LANES = 128


def _cdiv(a, b):
    return -(-a // b)


def _quantize_f32(x, a, c, levels):
    """Exact PyTorch op order: hardtanh(x/a) -> *L -> round -> /L -> *c."""
    y = jnp.clip(x / a, -1.0, 1.0)
    return jnp.round(y * levels) / levels * c


def _qsym_kernel(params_ref, x_ref, o_ref, *, levels):
    # params_ref: (2,) f32 in SMEM -> [softplus(a), softplus(c)]
    # x_ref / o_ref: (tile_rows, lanes) tile in VMEM, original dtype.
    a = params_ref[0]
    c = params_ref[1]
    x = x_ref[...].astype(jnp.float32)
    o_ref[...] = _quantize_f32(x, a, c, levels).astype(o_ref.dtype)


def _vmem_plan():
    """Pick (vmem_limit_bytes, target_block_bytes) for this TPU generation."""
    try:
        cap = int(getattr(pltpu.get_tpu_info(), "vmem_capacity_bytes", 0)) or None
    except Exception:
        cap = None
    if cap is None:
        cap = 64 * 1024 * 1024  # conservative: assume v7x-class per-core VMEM
    if cap <= 64 * 1024 * 1024:
        vmem_limit = 48 * 1024 * 1024   # v7x: 64 MiB physical per TC
    else:
        vmem_limit = 64 * 1024 * 1024   # v5e/v6e: 128 MiB physical
    # ~4x block for double-buffered in+out; the rest is compiler headroom.
    target_block = min(8 * 1024 * 1024, vmem_limit // 6)
    return vmem_limit, target_block


def _choose_lanes(total):
    """Widest lane-dense layout that divides the element count with >=8 rows."""
    for lanes in _LANE_CHOICES:
        if total % lanes == 0 and total // lanes >= 8:
            return lanes
    return _MIN_LANES


def _choose_tile_rows(rows, lanes, dtype_bytes, target_block_bytes):
    """Block row count: big blocks, sublane-aligned, >=2 (even) grid steps."""
    sub = max(8, 32 // dtype_bytes)          # 8 f32, 16 bf16, 32 int8
    max_tile = max(sub,
                   (target_block_bytes // (lanes * dtype_bytes)) // sub * sub)
    tensor_bytes = rows * lanes * dtype_bytes

    if rows <= max_tile:
        # Whole tensor fits in one block.  If it's big enough to matter, still
        # split into 2 steps so v7x's two TensorCores both run.
        if rows >= 2 * sub and tensor_bytes >= (1 << 20):
            half = _cdiv(rows, 2)
            return min(rows, _cdiv(half, sub) * sub)
        return rows

    # Prefer an even number of grid steps for megacore balance.
    steps = _cdiv(rows, max_tile)
    if steps % 2:
        steps += 1
    tile = _cdiv(_cdiv(rows, steps), sub) * sub
    return max(sub, min(tile, max_tile))


def q_sym_forward(x, a_param, c_param, n_lv):
    """Pallas implementation of Q_Sym.forward.

    x:        activation tensor (e.g. NCHW), any float dtype.
    a_param:  f32 scalar parameter (pre-softplus), shape (1,)
    c_param:  f32 scalar parameter (pre-softplus), shape (1,)
    n_lv:     python int; 0 means pass-through.
    """
    if n_lv == 0:
        return x
    levels = n_lv // 2 - 1
    if levels <= 0:
        # PyTorch module has the same divide-by-zero hazard; fail loudly here.
        raise ValueError("Q_Sym requires n_lv >= 4 (n_lv//2 - 1 must be > 0)")
    levels = float(levels)

    orig_shape = x.shape
    dtype = x.dtype
    total = int(np.prod(orig_shape)) if orig_shape else 1
    if total == 0:
        return x

    a_sp = jax.nn.softplus(a_param.astype(jnp.float32).reshape(()))
    c_sp = jax.nn.softplus(c_param.astype(jnp.float32).reshape(()))
    params = jnp.stack([a_sp, c_sp]).astype(jnp.float32)

    x_flat = jnp.reshape(x, (-1,))

    # Degenerate tiny tensors: not worth a kernel launch.
    if total < _MIN_LANES:
        out = _quantize_f32(x_flat.astype(jnp.float32), a_sp, c_sp, levels)
        return jnp.reshape(out.astype(dtype), orig_shape)

    lanes = _choose_lanes(total)
    main = (total // lanes) * lanes     # aligned prefix processed by the kernel
    tail = total - main                 # < lanes elements, only if misaligned
    rows = main // lanes

    x_main = x_flat if tail == 0 else x_flat[:main]
    x2d = jnp.reshape(x_main, (rows, lanes))

    dtype_bytes = jnp.dtype(dtype).itemsize
    vmem_limit, target_block = _vmem_plan()
    tile_rows = _choose_tile_rows(rows, lanes, dtype_bytes, target_block)
    grid = (pl.cdiv(rows, tile_rows),)

    kernel = functools.partial(_qsym_kernel, levels=levels)

    out2d = pl.pallas_call(
        kernel,
        out_shape=jax.ShapeDtypeStruct((rows, lanes), dtype),
        grid_spec=pltpu.PrefetchScalarGridSpec(
            num_scalar_prefetch=0,
            grid=grid,
            in_specs=[
                pl.BlockSpec(memory_space=pltpu.SMEM),            # (2,) scalars
                pl.BlockSpec((tile_rows, lanes), lambda i: (i, 0)),
            ],
            out_specs=pl.BlockSpec((tile_rows, lanes), lambda i: (i, 0)),
        ),
        compiler_params=pltpu.CompilerParams(
            dimension_semantics=("parallel",),
            vmem_limit_bytes=vmem_limit),
        cost_estimate=pl.CostEstimate(
            flops=6 * main,
            transcendentals=main,                 # per-element divide (x / a)
            bytes_accessed=2 * main * dtype_bytes),
    )(params, x2d)

    out_main = jnp.reshape(out2d, (main,))
    if tail:
        out_tail = _quantize_f32(
            x_flat[main:].astype(jnp.float32), a_sp, c_sp, levels).astype(dtype)
        out_flat = jnp.concatenate([out_main, out_tail])
    else:
        out_flat = out_main
    return jnp.reshape(out_flat, orig_shape)


def q_sym_reference(x, a_param, c_param, n_lv):
    """Pure-JAX reference mirroring the PyTorch module exactly."""
    if n_lv == 0:
        return x
    a = jax.nn.softplus(a_param)
    c = jax.nn.softplus(c_param)
    y = jnp.clip(x / a, -1.0, 1.0)
    lv = n_lv // 2 - 1
    return jnp.round(y * lv) / lv * c


if __name__ == "__main__":
    key = jax.random.PRNGKey(0)
    k1, k2 = jax.random.split(key)

    # Deterministic parameter init, mirroring Q_Sym.initialize(n_lv, offset, diff):
    #   a = c = log(exp(offset + diff) - 1)  =>  softplus(a) = offset + diff
    n_lv = 16
    offset, diff = 0.5, 0.3
    raw = float(np.log(np.exp(offset + diff) - 1.0))
    a_param = jnp.full((1,), raw, dtype=jnp.float32)
    c_param = jnp.full((1,), raw, dtype=jnp.float32)

    # Small NCHW activation tensor (PyTorch conv layout); 128-aligned count.
    x = jax.random.normal(k1, (2, 4, 16, 16), dtype=jnp.float32)
    out = jax.block_until_ready(q_sym_forward(x, a_param, c_param, n_lv))
    ref = q_sym_reference(x, a_param, c_param, n_lv)
    np.testing.assert_allclose(np.asarray(out), np.asarray(ref),
                               rtol=1e-5, atol=1e-6)

    # Misaligned element count -> aligned-prefix kernel + jnp tail path.
    x_odd = jax.random.normal(k2, (5, 7, 31), dtype=jnp.float32)
    out_odd = jax.block_until_ready(q_sym_forward(x_odd, a_param, c_param, n_lv))
    ref_odd = q_sym_reference(x_odd, a_param, c_param, n_lv)
    np.testing.assert_allclose(np.asarray(out_odd), np.asarray(ref_odd),
                               rtol=1e-5, atol=1e-6)

    # n_lv == 0 pass-through branch (pure identity, no kernel launch).
    out0 = q_sym_forward(x, a_param, c_param, 0)
    np.testing.assert_array_equal(np.asarray(out0), np.asarray(x))

    print("KERNEL_OK")
</pallas_src>

<mosaic_0001>
module attributes {stable_mosaic.version = 11 : i64} {
  func.func @_qsym_kernel(%arg0: i32, %arg1: memref<2xf32, #tpu.memory_space<smem>>, %arg2: memref<8x256xf32, #tpu.memory_space<vmem>>, %arg3: memref<8x256xf32, #tpu.memory_space<vmem>>) attributes {dimension_semantics = [#tpu.dimension_semantics<parallel>], iteration_bounds = array<i64: 1>, scalar_prefetch = 0 : i64, scratch_operands = 0 : i64, tpu.core_type = #tpu.core_type<tc>, window_params = [{transform_indices = @transform_0, window_bounds = array<i64: 2>}, {transform_indices = @transform_1, window_bounds = array<i64: 8, 256>}, {transform_indices = @transform_2, window_bounds = array<i64: 8, 256>}]} {
    %c0 = arith.constant 0 : index
    %0 = memref.load %arg1[%c0] : memref<2xf32, #tpu.memory_space<smem>>
    %c1 = arith.constant 1 : index
    %1 = memref.load %arg1[%c1] : memref<2xf32, #tpu.memory_space<smem>>
    %c0_0 = arith.constant 0 : index
    %c0_1 = arith.constant 0 : index
    %2 = vector.load %arg2[%c0_0, %c0_1] : memref<8x256xf32, #tpu.memory_space<vmem>>, vector<8x256xf32>
    %3 = vector.broadcast %0 : f32 to vector<8x256xf32>
    %4 = arith.divf %2, %3 : vector<8x256xf32>
    %cst = arith.constant -1.000000e+00 : f32
    %cst_2 = arith.constant 1.000000e+00 : f32
    %5 = vector.broadcast %cst : f32 to vector<8x256xf32>
    %6 = arith.maximumf %5, %4 : vector<8x256xf32>
    %7 = vector.broadcast %cst_2 : f32 to vector<8x256xf32>
    %8 = arith.minimumf %7, %6 : vector<8x256xf32>
    %cst_3 = arith.constant 7.000000e+00 : f32
    %9 = vector.broadcast %cst_3 : f32 to vector<8x256xf32>
    %10 = arith.mulf %8, %9 : vector<8x256xf32>
    %11 = math.roundeven %10 : vector<8x256xf32>
    %cst_4 = arith.constant 7.000000e+00 : f32
    %12 = vector.broadcast %cst_4 : f32 to vector<8x256xf32>
    %13 = arith.divf %11, %12 : vector<8x256xf32>
    %14 = vector.broadcast %1 : f32 to vector<8x256xf32>
    %15 = arith.mulf %13, %14 : vector<8x256xf32>
    %c0_5 = arith.constant 0 : index
    %c0_6 = arith.constant 0 : index
    %16 = vector.load %arg3[%c0_5, %c0_6] : memref<8x256xf32, #tpu.memory_space<vmem>>, vector<8x256xf32>
    tpu.vector_store %arg3[%c0_5, %c0_6], %15 {strides = array<i32>} : memref<8x256xf32, #tpu.memory_space<vmem>>, vector<8x256xf32>,
    return
  }
  func.func @transform_0(%arg0: i32) -> i32 {
    %c0_i32 = arith.constant 0 : i32
    %c0_i32_0 = arith.constant 0 : i32
    return %c0_i32 : i32
  }
  func.func @transform_1(%arg0: i32) -> (i32, i32) {
    %c0_i32 = arith.constant 0 : i32
    %c0_i32_0 = arith.constant 0 : i32
    return %arg0, %c0_i32 : i32, i32
  }
  func.func @transform_2(%arg0: i32) -> (i32, i32) {
    %c0_i32 = arith.constant 0 : i32
    %c0_i32_0 = arith.constant 0 : i32
    return %arg0, %c0_i32 : i32, i32
  }
}

</mosaic_0001>

<llo_original>
// kernel: tpu_custom_call.1
$region0: #{tpu_custom_call.1}
  #allocation0 [shape = 'u32[]', space=smem, size = 0x4, offset = 0x4, fixed_abs, tag = 'smem constant byte address 0x4 - core index']
  #allocation1 [shape = 'u32[72,128]{1,0:T(1,128)}', space=vmem, size = 0x9000, scoped, tag = 'internal scratch']
  %s0 = inlined_call_operand.hbm [shape: f32[2], index: 0, kind: input, shape index: {}]
  %s1 = inlined_call_operand.hbm [shape: f32[8,256], index: 1, kind: input, shape index: {}]
  %s2 = inlined_call_operand.hbm [shape: f32[8,256], index: 2, kind: output, shape index: {}]
  %s3 = sld [smem:[#allocation0]]
  $region26: #{tpu_custom_call.1} parent=0
    _
  %s5 = ssub.s32 1, %s3
  %s6 = scalar_select 0, %s5, %s3
  $region1: #{tpu_custom_call.1} parent=0
    #allocation2 [shape = 'u8[512]{0}', space=smem, size = 0x200, scoped, tag = 'input window, operand 0, single buffered']
    #allocation3 [shape = 's32[1]{0}', space=sflag, size = 0x4, scoped, tag = 'scoped memory for tpu_custom_call.1']
    #allocation4 [shape = 's32[1]{0}', space=sflag, size = 0x4, scoped, tag = 'scoped memory for tpu_custom_call.1']
    #allocation5 [shape = 's32[1]{0}', space=sflag, size = 0x4, scoped, tag = 'scoped memory for tpu_custom_call.1']
    #allocation6 [shape = 'u8[8192]{0}', space=vmem, size = 0x2000, scoped, tag = 'input window, operand 1, single buffered']
    #allocation7 [shape = 'u8[8192]{0}', space=vmem, size = 0x2000, scoped, tag = 'output window, operand 0, single buffered']
    %7 = vsyncpa [#allocation5], 0
    %8 = vsyncpa [#allocation3], 0
    %9 = vsyncpa [#allocation4], 0
    // Predicated region
    $region2: #{tpu_custom_call.1} parent=1 // pred_check
      _
    $region3: #{tpu_custom_call.1} parent=1 // pred_check_branch
      %11 = sbr.rel (0) target = $region5
    $region4: #{tpu_custom_call.1} parent=1 // pred_region
      %13 = vsyncadd [#allocation5], 0
      %s15 = sshll.u32 %s0, 4
      %s16 = int_to_ptr.hbm [resolvable:$true] %s15
      %18 = dma.hbm_to_smem %s16, 16, [#allocation2], [#allocation5]
    $region5: #{tpu_custom_call.1} parent=1 // pred_fallthru
      _
    // Predicated region
    $region6: #{tpu_custom_call.1} parent=1 // pred_check
      _
    $region7: #{tpu_custom_call.1} parent=1 // pred_check_branch
      %20 = sbr.rel (0) target = $region9
    $region8: #{tpu_custom_call.1} parent=1 // pred_region
      %22 = vsyncadd [#allocation3], 0
      %s24 = sshll.u32 %s1, 4
      %s25 = int_to_ptr.hbm [resolvable:$true] %s24
      %s26 = sshll.u32 [#allocation6], 4
      %s27 = int_to_ptr.vmem [resolvable:$true] %s26
      %29 = dma.hbm_to_vmem [thread:$0]  %s25, 256, %s27, [#allocation3]
    $region9: #{tpu_custom_call.1} parent=1 // pred_fallthru
      _
    // Predicated region
    $region10: #{tpu_custom_call.1} parent=1 // pred_check
      _
    $region11: #{tpu_custom_call.1} parent=1 // pred_check_branch
      %31 = sbr.rel (0) target = $region13
    $region12: #{tpu_custom_call.1} parent=1 // pred_region
      %33 = dma.done [#allocation5], 16
    $region13: #{tpu_custom_call.1} parent=1 // pred_fallthru
      _
    // Predicated region
    $region14: #{tpu_custom_call.1} parent=1 // pred_check
      _
    $region15: #{tpu_custom_call.1} parent=1 // pred_check_branch
      %35 = sbr.rel (0) target = $region17
    $region16: #{tpu_custom_call.1} parent=1 // pred_region
      %37 = dma.done [#allocation3], 256
    $region17: #{tpu_custom_call.1} parent=1 // pred_fallthru
      _
    %38 = sfence
    %s39 = sld [smem:[#allocation2]]
    %s40 = sld [smem:[#allocation2 + $0x1]]
    %v41 = vld [vmem:[#allocation6] sm:$0xff]
    %v42 = vld [vmem:[#allocation6 + $0x8] sm:$0xff]
    %v43 = vstv %s39
    %v44 = vrcp.pop %v43
    %v45 = vmul.f32 %v43, %v44
    %v46 = vsub.f32 1.0, %v45
    %v47 = vmul.f32 %v44, %v46
    %v48 = vadd.f32 %v44, %v47
    %vm49 = vweird.f32 %v43
    %vm50 = vweird.f32 %v44
    %vm51 = vmor %vm49, %vm50
    %v52 = vsel %vm51, %v44, %v48
    %v53 = vand.u32 2147483647, %v43
    %vm54 = vcmp.eq.f32.partialorder %v53, 8.507059e+37
    %v55 = vand.u32 %v43, 2147483648
    %v56 = vor.u32 1.1754944e-38, %v55
    %v57 = vsel %vm54, %v56, %v52
    %v58 = vmul.f32 %v41, %v57
    %v59 = vmul.f32 %v42, %v57
    %v60 = vmax.f32 %v58, -1.0
    %v61 = vmax.f32 %v59, -1.0
    %v62 = vmin.f32 %v60, 1.0
    %v63 = vmin.f32 %v61, 1.0
    %v64 = vmul.f32 %v62, 7.0
    %v65 = vmul.f32 %v63, 7.0
    %v66 = vround.ne.pseudo %v64
    %v67 = vround.ne.pseudo %v65
    %v68 = vrcp.pop 7.0
    %v69 = vmul.f32 7.0, %v68
    %v70 = vsub.f32 1.0, %v69
    %v71 = vmul.f32 %v68, %v70
    %v72 = vadd.f32 %v68, %v71
    %vm73 = vweird.f32 %v68
    %v74 = vsel %vm73, %v68, %v72
    %v75 = vmul.f32 %v66, %v74
    %v76 = vmul.f32 %v67, %v74
    %v77 = vstv %s40
    %v78 = vmul.f32 %v75, %v77
    %v79 = vmul.f32 %v76, %v77
    %80 = vst [vmem:[#allocation7] sm:$0xff] %v78
    %81 = vst [vmem:[#allocation7 + $0x8] sm:$0xff] %v79
    // Predicated region
    $region18: #{tpu_custom_call.1} parent=1 // pred_check
      _
    $region19: #{tpu_custom_call.1} parent=1 // pred_check_branch
      %83 = sbr.rel (0) target = $region21
    $region20: #{tpu_custom_call.1} parent=1 // pred_region
      %85 = vsyncadd [#allocation4], 0
      %s87 = sshll.u32 [#allocation7], 4
      %s88 = int_to_ptr.vmem [resolvable:$true] %s87
      %s89 = sshll.u32 %s2, 4
      %s90 = int_to_ptr.hbm [resolvable:$true] %s89
      %92 = dma.vmem_to_hbm [thread:$0]  %s88, 256, %s90, [#allocation4]
    $region21: #{tpu_custom_call.1} parent=1 // pred_fallthru
      _
    // Predicated region
    $region22: #{tpu_custom_call.1} parent=1 // pred_check
      _
    $region23: #{tpu_custom_call.1} parent=1 // pred_check_branch
      %94 = sbr.rel (0) target = $region25
    $region24: #{tpu_custom_call.1} parent=1 // pred_region
      %96 = dma.done [#allocation4], 256
    $region25: #{tpu_custom_call.1} parent=1 // pred_fallthru
      _
    %97 = vsyncpa [#allocation3], 1
    %98 = vsyncpa [#allocation4], 1
    %99 = vsyncpa [#allocation5], 1

</llo_original>
